<compile_context>
chip_gen: v7x
topology: tpu7x:2x2x1
jax: 0.10.0
libtpu: 0.0.40
codegen_flags: <defaults>
</compile_context>

<pallas_src>
import jax
import jax.numpy as jnp
from jax.experimental import pallas as pl
from jax.experimental.pallas import tpu as pltpu

_GELU_C0 = 0.7978845608028654       # sqrt(2/pi)
_GELU_C0C1 = _GELU_C0 * 0.044715    # sqrt(2/pi) * 0.044715


def _gelu_tanh_f32(h):
    # tanh-approximate GELU (matches torch.nn.GELU(approximate='tanh')), f32.
    h2 = h * h
    return 0.5 * h * (1.0 + jnp.tanh(h * (_GELU_C0 + _GELU_C0C1 * h2)))


# ----------------------------------------------------------------------------
# Kernels
# ----------------------------------------------------------------------------

def _mlp_resident_kernel(x_ref, wfc_ref, bfc_ref, wproj_ref, bproj_ref, o_ref):
    """Weights fully VMEM-resident; grid = (Mp // tm,)."""
    # x_ref: (tm, D) input dtype; wfc_ref: (D, H) bf16; bfc_ref: (1, H) f32
    # wproj_ref: (H, D) bf16; bproj_ref: (1, D) f32; o_ref: (tm, D)
    x = x_ref[...].astype(wfc_ref.dtype)                      # cast on VPU, in-kernel
    h = jnp.dot(x, wfc_ref[...], preferred_element_type=jnp.float32) + bfc_ref[...]
    g = _gelu_tanh_f32(h)
    out = jnp.dot(g.astype(wproj_ref.dtype), wproj_ref[...],
                  preferred_element_type=jnp.float32) + bproj_ref[...]
    o_ref[...] = out.astype(o_ref.dtype)


def _mlp_streaming_kernel(x_ref, wfc_ref, bfc_ref, wproj_ref, bproj_ref, o_ref,
                          acc_ref):
    """Hidden dim H streamed in tiles of th; grid = (Mp // tm, H // th)."""
    j = pl.program_id(1)

    @pl.when(j == 0)
    def _init():
        acc_ref[...] = jnp.zeros_like(acc_ref)

    x = x_ref[...].astype(wfc_ref.dtype)
    h = jnp.dot(x, wfc_ref[...], preferred_element_type=jnp.float32) + bfc_ref[...]
    g = _gelu_tanh_f32(h)
    acc_ref[...] += jnp.dot(g.astype(wproj_ref.dtype), wproj_ref[...],
                            preferred_element_type=jnp.float32)

    @pl.when(j == pl.num_programs(1) - 1)
    def _finalize():
        o_ref[...] = (acc_ref[...] + bproj_ref[...]).astype(o_ref.dtype)


# ----------------------------------------------------------------------------
# Tiling / budget helpers
# ----------------------------------------------------------------------------

def _round_up(x, m):
    return ((x + m - 1) // m) * m


def _vmem_budget_bytes(max_vmem_bytes=None):
    """Per-TensorCore VMEM budget with headroom for compiler scratch/semaphores."""
    if max_vmem_bytes is not None:
        return int(max_vmem_bytes)
    cap = 64 * 2**20  # conservative fallback = v7x physical per-TC VMEM
    try:
        cap = int(pltpu.get_tpu_info().vmem_capacity_bytes)
    except Exception:
        pass
    # ~85% of physical: ~54 MiB on v7x (64 MiB), ~109 MiB on v5e/v6e (128 MiB).
    return int(cap * 0.85)


def _pick_row_tile(M, target):
    """Row tile: multiple of 8, big enough for the MXU, >=2 tiles when possible
    so the 'parallel' M axis can shard across both v7x TensorCores."""
    tm = max(8, min(int(target), _round_up(M, 8)))
    tm = _round_up(tm, 8)
    if M >= 16 and pl.cdiv(M, tm) < 2:
        tm = _round_up(pl.cdiv(M, 2), 8)
    return int(tm)


def _resident_vmem_estimate(D, H, tm, xsz, osz, csz):
    return (2 * tm * D * xsz              # x row tiles (double-buffered, in dtype)
            + 2 * tm * D * osz            # out row tiles
            + 2 * (D * H + H * D) * csz   # weights (conservatively double-buffered)
            + 2 * tm * H * 4              # f32 h / GELU intermediates
            + tm * D * 4                  # f32 c_proj result before cast
            + 4 * (H + D) * 4 * 8)        # bias tiles incl. sublane padding


def _streaming_vmem_estimate(D, tm, th, xsz, osz, csz, nbuf=3):
    return (2 * tm * D * xsz              # x row tiles
            + 2 * tm * D * osz            # out row tiles
            + nbuf * D * th * csz         # W_fc column tiles (Buffered(nbuf))
            + nbuf * th * D * csz         # W_proj row tiles
            + tm * D * 4                  # f32 accumulator scratch
            + 2 * tm * th * 4             # f32 h / GELU intermediates
            + 4 * (th + D) * 4 * 8)       # bias tiles incl. sublane padding


def _pick_hidden_tile(H, D, tm, xsz, osz, csz, budget):
    """Largest th (multiple of 128, dividing H) whose streamed working set fits."""
    if H % 128 != 0:
        return H
    candidates = [t for t in range(128, H + 1, 128) if H % t == 0]
    for t in sorted(candidates, reverse=True):
        if _streaming_vmem_estimate(D, tm, t, xsz, osz, csz) <= budget:
            return t
    return candidates[0]


# ----------------------------------------------------------------------------
# Wrapper
# ----------------------------------------------------------------------------

def mlp_pallas(x, w_fc, b_fc, w_proj, b_proj, *, tm=512, th=None,
               compute_dtype=jnp.bfloat16, max_vmem_bytes=None,
               force_streaming=False):
    """GPT-2 MLP forward: c_proj(gelu_tanh(c_fc(x))).

    x:      [B, T, D]
    w_fc:   [D, 4D]  (== torch c_fc.weight.T)     b_fc:   [4D]
    w_proj: [4D, D]  (== torch c_proj.weight.T)   b_proj: [D]
    """
    B, T, D = x.shape
    H = w_fc.shape[1]
    M = B * T

    budget = _vmem_budget_bytes(max_vmem_bytes)

    csz = jnp.dtype(compute_dtype).itemsize
    xsz = jnp.dtype(x.dtype).itemsize
    osz = xsz

    tm = _pick_row_tile(M, tm)
    Mp = int(pl.cdiv(M, tm)) * tm

    x2 = x.reshape(M, D)                       # no dtype cast here (done in-kernel)
    if Mp != M:
        x2 = jnp.pad(x2, ((0, Mp - M), (0, 0)))

    # Cast weights only if needed (no-op when caller pre-casts at load time).
    wfc = w_fc if w_fc.dtype == compute_dtype else w_fc.astype(compute_dtype)
    wproj = w_proj if w_proj.dtype == compute_dtype else w_proj.astype(compute_dtype)
    bfc2 = b_fc.reshape(1, H).astype(jnp.float32)
    bproj2 = b_proj.reshape(1, D).astype(jnp.float32)

    resident_est = _resident_vmem_estimate(D, H, tm, xsz, osz, csz)
    use_resident = (not force_streaming) and (resident_est <= budget)

    if use_resident:
        grid = (Mp // tm,)
        out2 = pl.pallas_call(
            _mlp_resident_kernel,
            out_shape=jax.ShapeDtypeStruct((Mp, D), x.dtype),
            grid_spec=pltpu.PrefetchScalarGridSpec(
                num_scalar_prefetch=0,
                grid=grid,
                in_specs=[
                    pl.BlockSpec((tm, D), lambda i: (i, 0)),   # x row tile
                    pl.BlockSpec((D, H), lambda i: (0, 0)),    # W_fc (resident)
                    pl.BlockSpec((1, H), lambda i: (0, 0)),    # b_fc
                    pl.BlockSpec((H, D), lambda i: (0, 0)),    # W_proj (resident)
                    pl.BlockSpec((1, D), lambda i: (0, 0)),    # b_proj
                ],
                out_specs=pl.BlockSpec((tm, D), lambda i: (i, 0)),
            ),
            compiler_params=pltpu.CompilerParams(
                dimension_semantics=("parallel",),
                vmem_limit_bytes=int(budget),
            ),
        )(x2, wfc, bfc2, wproj, bproj2)
    else:
        th_ = int(th) if th is not None else _pick_hidden_tile(
            H, D, tm, xsz, osz, csz, budget)
        assert H % th_ == 0, "hidden tile must divide H"
        grid = (Mp // tm, H // th_)
        out2 = pl.pallas_call(
            _mlp_streaming_kernel,
            out_shape=jax.ShapeDtypeStruct((Mp, D), x.dtype),
            grid_spec=pltpu.PrefetchScalarGridSpec(
                num_scalar_prefetch=0,
                grid=grid,
                in_specs=[
                    pl.BlockSpec((tm, D), lambda i, j: (i, 0)),    # x row tile
                    pl.BlockSpec((D, th_), lambda i, j: (0, j),    # W_fc col tile
                                 pipeline_mode=pl.Buffered(3)),
                    pl.BlockSpec((1, th_), lambda i, j: (0, j)),   # b_fc tile
                    pl.BlockSpec((th_, D), lambda i, j: (j, 0),    # W_proj row tile
                                 pipeline_mode=pl.Buffered(3)),
                    pl.BlockSpec((1, D), lambda i, j: (0, 0)),     # b_proj
                ],
                out_specs=pl.BlockSpec((tm, D), lambda i, j: (i, 0)),
                scratch_shapes=[pltpu.VMEM((tm, D), jnp.float32)],
            ),
            compiler_params=pltpu.CompilerParams(
                dimension_semantics=("parallel", "arbitrary"),
                vmem_limit_bytes=int(budget),
            ),
        )(x2, wfc, bfc2, wproj, bproj2)

    if Mp != M:
        out2 = out2[:M]
    return out2.reshape(B, T, D)


# ----------------------------------------------------------------------------
# Reference & self-test
# ----------------------------------------------------------------------------

def mlp_reference(x, w_fc, b_fc, w_proj, b_proj, compute_dtype=jnp.float32):
    xd = x.astype(compute_dtype)
    h = jnp.dot(xd, w_fc.astype(compute_dtype),
                preferred_element_type=jnp.float32) + b_fc.astype(jnp.float32)
    g = 0.5 * h * (1.0 + jnp.tanh(_GELU_C0 * (h + 0.044715 * h ** 3)))
    out = jnp.dot(g.astype(compute_dtype), w_proj.astype(compute_dtype),
                  preferred_element_type=jnp.float32) + b_proj.astype(jnp.float32)
    return out.astype(x.dtype)


def _make_inputs(key, B, T, D):
    H = 4 * D
    kx, kw1, kb1, kw2, kb2 = jax.random.split(key, 5)
    x = jax.random.normal(kx, (B, T, D), dtype=jnp.float32)
    # nn.Linear(D, 4D): torch weight [4D, D]; stored here as W_fc = weight.T = [D, 4D].
    w_fc = jax.random.normal(kw1, (D, H), dtype=jnp.float32) * 0.02
    b_fc = jax.random.normal(kb1, (H,), dtype=jnp.float32) * 0.02
    # nn.Linear(4D, D): torch weight [D, 4D]; stored here as W_proj = weight.T = [4D, D].
    w_proj = jax.random.normal(kw2, (H, D), dtype=jnp.float32) * 0.02
    b_proj = jax.random.normal(kb2, (D,), dtype=jnp.float32) * 0.02
    return x, w_fc, b_fc, w_proj, b_proj


if __name__ == "__main__":
    key = jax.random.PRNGKey(0)
    k1, k2 = jax.random.split(key, 2)

    # --- Test 1: weight-resident fast path (default) -------------------------
    B, T, D = 2, 8, 32      # n_embed=32 -> hidden=128
    x, w_fc, b_fc, w_proj, b_proj = _make_inputs(k1, B, T, D)

    out = jax.block_until_ready(mlp_pallas(x, w_fc, b_fc, w_proj, b_proj))
    assert out.shape == (B, T, D)

    ref_bf16 = mlp_reference(x, w_fc, b_fc, w_proj, b_proj, compute_dtype=jnp.bfloat16)
    assert jnp.allclose(out, ref_bf16, atol=5e-3, rtol=5e-3), \
        "resident path mismatch vs bf16 reference"
    ref_f32 = mlp_reference(x, w_fc, b_fc, w_proj, b_proj, compute_dtype=jnp.float32)
    assert jnp.allclose(out, ref_f32, atol=3e-2, rtol=3e-2), \
        "resident path mismatch vs f32 reference"

    # --- Test 2: H-streamed fallback path (forced), exercises the accumulator ---
    B2, T2, D2 = 2, 8, 64   # n_embed=64 -> hidden=256, streamed as two th=128 tiles
    x2, w_fc2, b_fc2, w_proj2, b_proj2 = _make_inputs(k2, B2, T2, D2)

    out2 = jax.block_until_ready(
        mlp_pallas(x2, w_fc2, b_fc2, w_proj2, b_proj2,
                   force_streaming=True, th=128))
    assert out2.shape == (B2, T2, D2)

    ref2 = mlp_reference(x2, w_fc2, b_fc2, w_proj2, b_proj2, compute_dtype=jnp.bfloat16)
    assert jnp.allclose(out2, ref2, atol=5e-3, rtol=5e-3), \
        "streaming path mismatch vs bf16 reference"

    print("KERNEL_OK")
</pallas_src>

<mosaic_0001>
module attributes {stable_mosaic.version = 11 : i64} {
  func.func @_mlp_resident_kernel(%arg0: i32, %arg1: memref<8x32xf32, #tpu.memory_space<vmem>>, %arg2: memref<32x128xbf16, #tpu.memory_space<vmem>>, %arg3: memref<1x128xf32, #tpu.memory_space<vmem>>, %arg4: memref<128x32xbf16, #tpu.memory_space<vmem>>, %arg5: memref<1x32xf32, #tpu.memory_space<vmem>>, %arg6: memref<8x32xf32, #tpu.memory_space<vmem>>) attributes {dimension_semantics = [#tpu.dimension_semantics<parallel>], iteration_bounds = array<i64: 2>, scalar_prefetch = 0 : i64, scratch_operands = 0 : i64, tpu.core_type = #tpu.core_type<tc>, window_params = [{transform_indices = @transform_0, window_bounds = array<i64: 8, 32>}, {pipeline_mode = #tpu.pipeline_mode<synchronous>, transform_indices = @transform_1, window_bounds = array<i64: 32, 128>}, {pipeline_mode = #tpu.pipeline_mode<synchronous>, transform_indices = @transform_2, window_bounds = array<i64: 1, 128>}, {pipeline_mode = #tpu.pipeline_mode<synchronous>, transform_indices = @transform_3, window_bounds = array<i64: 128, 32>}, {pipeline_mode = #tpu.pipeline_mode<synchronous>, transform_indices = @transform_4, window_bounds = array<i64: 1, 32>}, {transform_indices = @transform_5, window_bounds = array<i64: 8, 32>}]} {
    %c0 = arith.constant 0 : index
    %c0_0 = arith.constant 0 : index
    %0 = vector.load %arg1[%c0, %c0_0] : memref<8x32xf32, #tpu.memory_space<vmem>>, vector<8x32xf32>
    %1 = arith.truncf %0 : vector<8x32xf32> to vector<8x32xbf16>
    %c0_1 = arith.constant 0 : index
    %c0_2 = arith.constant 0 : index
    %2 = vector.load %arg2[%c0_1, %c0_2] : memref<32x128xbf16, #tpu.memory_space<vmem>>, vector<32x128xbf16>
    %cst = arith.constant dense<0.000000e+00> : vector<8x128xf32>
    %3 = tpu.matmul %1, %2, %cst {dimension_numbers = #tpu.dot_dimension_numbers<[1], [0], [0], [1], [0, 0, 1, 1], [], []>} : vector<8x32xbf16>, vector<32x128xbf16>, vector<8x128xf32> -> vector<8x128xf32>
    %c0_3 = arith.constant 0 : index
    %c0_4 = arith.constant 0 : index
    %4 = vector.load %arg3[%c0_3, %c0_4] : memref<1x128xf32, #tpu.memory_space<vmem>>, vector<1x128xf32>
    %5 = vector.broadcast %4 : vector<1x128xf32> to vector<8x128xf32>
    %6 = arith.addf %3, %5 : vector<8x128xf32>
    %7 = arith.mulf %6, %6 : vector<8x128xf32>
    %cst_5 = arith.constant 5.000000e-01 : f32
    %8 = vector.broadcast %cst_5 : f32 to vector<8x128xf32>
    %9 = arith.mulf %8, %6 : vector<8x128xf32>
    %cst_6 = arith.constant 0.0356774069 : f32
    %10 = vector.broadcast %cst_6 : f32 to vector<8x128xf32>
    %11 = arith.mulf %10, %7 : vector<8x128xf32>
    %cst_7 = arith.constant 0.797884583 : f32
    %12 = vector.broadcast %cst_7 : f32 to vector<8x128xf32>
    %13 = arith.addf %12, %11 : vector<8x128xf32>
    %14 = arith.mulf %6, %13 : vector<8x128xf32>
    %15 = math.tanh %14 : vector<8x128xf32>
    %cst_8 = arith.constant 1.000000e+00 : f32
    %16 = vector.broadcast %cst_8 : f32 to vector<8x128xf32>
    %17 = arith.addf %16, %15 : vector<8x128xf32>
    %18 = arith.mulf %9, %17 : vector<8x128xf32>
    %19 = arith.truncf %18 : vector<8x128xf32> to vector<8x128xbf16>
    %c0_9 = arith.constant 0 : index
    %c0_10 = arith.constant 0 : index
    %20 = vector.load %arg4[%c0_9, %c0_10] : memref<128x32xbf16, #tpu.memory_space<vmem>>, vector<128x32xbf16>
    %cst_11 = arith.constant dense<0.000000e+00> : vector<8x32xf32>
    %21 = tpu.matmul %19, %20, %cst_11 {dimension_numbers = #tpu.dot_dimension_numbers<[1], [0], [0], [1], [0, 0, 1, 1], [], []>} : vector<8x128xbf16>, vector<128x32xbf16>, vector<8x32xf32> -> vector<8x32xf32>
    %c0_12 = arith.constant 0 : index
    %c0_13 = arith.constant 0 : index
    %22 = vector.load %arg5[%c0_12, %c0_13] : memref<1x32xf32, #tpu.memory_space<vmem>>, vector<1x32xf32>
    %23 = vector.broadcast %22 : vector<1x32xf32> to vector<8x32xf32>
    %24 = arith.addf %21, %23 : vector<8x32xf32>
    %c0_14 = arith.constant 0 : index
    %c0_15 = arith.constant 0 : index
    %25 = vector.load %arg6[%c0_14, %c0_15] : memref<8x32xf32, #tpu.memory_space<vmem>>, vector<8x32xf32>
    tpu.vector_store %arg6[%c0_14, %c0_15], %24 {strides = array<i32>} : memref<8x32xf32, #tpu.memory_space<vmem>>, vector<8x32xf32>,
    return
  }
  func.func @transform_0(%arg0: i32) -> (i32, i32) {
    %c0_i32 = arith.constant 0 : i32
    %c0_i32_0 = arith.constant 0 : i32
    return %arg0, %c0_i32 : i32, i32
  }
  func.func @transform_1(%arg0: i32) -> (i32, i32) {
    %c0_i32 = arith.constant 0 : i32
    %c0_i32_0 = arith.constant 0 : i32
    %c0_i32_1 = arith.constant 0 : i32
    return %c0_i32, %c0_i32_0 : i32, i32
  }
  func.func @transform_2(%arg0: i32) -> (i32, i32) {
    %c0_i32 = arith.constant 0 : i32
    %c0_i32_0 = arith.constant 0 : i32
    %c0_i32_1 = arith.constant 0 : i32
    return %c0_i32, %c0_i32_0 : i32, i32
  }
  func.func @transform_3(%arg0: i32) -> (i32, i32) {
    %c0_i32 = arith.constant 0 : i32
    %c0_i32_0 = arith.constant 0 : i32
    %c0_i32_1 = arith.constant 0 : i32
    return %c0_i32, %c0_i32_0 : i32, i32
  }
  func.func @transform_4(%arg0: i32) -> (i32, i32) {
    %c0_i32 = arith.constant 0 : i32
    %c0_i32_0 = arith.constant 0 : i32
    %c0_i32_1 = arith.constant 0 : i32
    return %c0_i32, %c0_i32_0 : i32, i32
  }
  func.func @transform_5(%arg0: i32) -> (i32, i32) {
    %c0_i32 = arith.constant 0 : i32
    %c0_i32_0 = arith.constant 0 : i32
    return %arg0, %c0_i32 : i32, i32
  }
}

</mosaic_0001>

<llo_original>
// kernel: tpu_custom_call.1
$region0: #{tpu_custom_call.1}
  #allocation0 [shape = 'u32[]', space=smem, size = 0x4, offset = 0x4, fixed_abs, tag = 'smem constant byte address 0x4 - core index']
  #allocation1 [shape = 'u32[144,128]{1,0:T(1,128)}', space=vmem, size = 0x12000, scoped, tag = 'internal scratch']
  %s0 = inlined_call_operand.vmem [shape: f32[16,32], index: 0, kind: input, shape index: {}]
  %s1 = inlined_call_operand.vmem [shape: bf16[32,128], index: 1, kind: input, shape index: {}]
  %s2 = inlined_call_operand.vmem [shape: f32[1,128], index: 2, kind: input, shape index: {}]
  %s3 = inlined_call_operand.vmem [shape: bf16[128,32], index: 3, kind: input, shape index: {}]
  %s4 = inlined_call_operand.vmem [shape: f32[1,32], index: 4, kind: input, shape index: {}]
  %s5 = inlined_call_operand.hbm [shape: f32[16,32], index: 5, kind: output, shape index: {}]
  %s6 = sld [smem:[#allocation0]]
  $region53: #{tpu_custom_call.1} parent=0
    _
  %s8 = ssub.s32 1, %s6
  %s9 = scalar_select 0, %s8, %s6
  $region1: #{tpu_custom_call.1} parent=0
    #allocation2 [shape = 'u8[8192]{0}', space=vmem, size = 0x2000, scoped, tag = 'output window, operand 0']
    #allocation3 [shape = 's32[2]{0}', space=sflag, size = 0x8, scoped, tag = 'scoped memory for tpu_custom_call.1']
    %10 = vsyncpa [#allocation3], 0
    %s11 = scalar_lea.sflag [#allocation3], 1
    %12 = vsyncpa %s11, 0
    loop: start=0, step=1, limit=4
    $region2: #{tpu_custom_call.1} parent=1 // loop_pre_header
      _
    $region3: #{tpu_custom_call.1} parent=1 // loop_header
      %s14 = sphi 0, %s18
      %p15 = scmp.ge.s32.totalorder %s14, 4
      %s24 = sphi 0, %s26
      %s27 = sphi 0, %s24
      %s28 = sphi 0, %s27
      %s44 = sphi 0, %s28
      %s48 = sphi 0, %s48
      %s50 = sphi 0, %s48
      %s51 = sphi 0, %s50
      %s65 = sphi 0, %s51
      %s69 = sphi 0, %s69
      %s71 = sphi 0, %s69
      %s72 = sphi 0, %s71
      %s86 = sphi 0, %s72
      %s90 = sphi 0, %s90
      %s92 = sphi 0, %s90
      %s93 = sphi 0, %s92
      %s107 = sphi 0, %s93
      %s111 = sphi 0, %s111
      %s113 = sphi 0, %s111
      %s114 = sphi 0, %s113
      %s128 = sphi 0, %s114
      %s134 = sphi 0, %s136
      %s137 = sphi 0, %s134
      %s138 = sphi 0, %s137
      %s154 = sphi 0, %s138
    $region4: #{tpu_custom_call.1} parent=1 // loop_header_branch
      %17 = sbr.rel (%p15) target = $region8
    $region5: #{tpu_custom_call.1} parent=1 // loop_body
      %s19 = ssub.s32 %s14, 1
      %s20 = ssub.s32 %s14, 2
      %s21 = sadd.s32 %s14, 1
      %s22 = ssub.s32 %s14, %s21
      %p23 = scmp.eq.s32.totalorder %s22, 0
      %s25 = sadd.s32 %s24, 1
      %s26 = scalar_select %p23, %s24, %s25
      %p29 = pneg %p23
      %p30 = scmp.eq.s32.totalorder %s14, 1
      %p31 = por %p29, %p30
      %p32 = scmp.ne.s32.totalorder %s24, %s27
      %p33 = scmp.eq.s32.totalorder %s14, 0
      %p34 = por %p32, %p33
      %p35 = scmp.ne.s32.totalorder %s24, %s27
      %p36 = scmp.eq.s32.totalorder %s19, 1
      %p37 = por %p35, %p36
      %p38 = scmp.ne.s32.totalorder %s27, %s28
      %p39 = scmp.eq.s32.totalorder %s19, 0
      %p40 = por %p38, %p39
      %p41 = scmp.ne.s32.totalorder %s27, %s28
      %p42 = scmp.eq.s32.totalorder %s20, 1
      %p43 = por %p41, %p42
      %p45 = scmp.ne.s32.totalorder %s28, %s44
      %p46 = scmp.eq.s32.totalorder %s20, 0
      %p47 = por %p45, %p46
      %s49 = sadd.s32 %s48, 1
      %p52 = scmp.eq.s32.totalorder %s14, 1
      %p53 = scmp.ne.s32.totalorder %s48, %s50
      %p54 = scmp.eq.s32.totalorder %s14, 0
      %p55 = por %p53, %p54
      %p56 = scmp.ne.s32.totalorder %s48, %s50
      %p57 = scmp.eq.s32.totalorder %s19, 1
      %p58 = por %p56, %p57
      %p59 = scmp.ne.s32.totalorder %s50, %s51
      %p60 = scmp.eq.s32.totalorder %s19, 0
      %p61 = por %p59, %p60
      %p62 = scmp.ne.s32.totalorder %s50, %s51
      %p63 = scmp.eq.s32.totalorder %s20, 1
      %p64 = por %p62, %p63
      %p66 = scmp.ne.s32.totalorder %s51, %s65
      %p67 = scmp.eq.s32.totalorder %s20, 0
      %p68 = por %p66, %p67
      %s70 = sadd.s32 %s69, 1
      %p73 = scmp.eq.s32.totalorder %s14, 1
      %p74 = scmp.ne.s32.totalorder %s69, %s71
      %p75 = scmp.eq.s32.totalorder %s14, 0
      %p76 = por %p74, %p75
      %p77 = scmp.ne.s32.totalorder %s69, %s71
      %p78 = scmp.eq.s32.totalorder %s19, 1
      %p79 = por %p77, %p78
      %p80 = scmp.ne.s32.totalorder %s71, %s72
      %p81 = scmp.eq.s32.totalorder %s19, 0
      %p82 = por %p80, %p81
      %p83 = scmp.ne.s32.totalorder %s71, %s72
      %p84 = scmp.eq.s32.totalorder %s20, 1
      %p85 = por %p83, %p84
      %p87 = scmp.ne.s32.totalorder %s72, %s86
      %p88 = scmp.eq.s32.totalorder %s20, 0
      %p89 = por %p87, %p88
      %s91 = sadd.s32 %s90, 1
      %p94 = scmp.eq.s32.totalorder %s14, 1
      %p95 = scmp.ne.s32.totalorder %s90, %s92
      %p96 = scmp.eq.s32.totalorder %s14, 0
      %p97 = por %p95, %p96
      %p98 = scmp.ne.s32.totalorder %s90, %s92
      %p99 = scmp.eq.s32.totalorder %s19, 1
      %p100 = por %p98, %p99
      %p101 = scmp.ne.s32.totalorder %s92, %s93
      %p102 = scmp.eq.s32.totalorder %s19, 0
      %p103 = por %p101, %p102
      %p104 = scmp.ne.s32.totalorder %s92, %s93
      %p105 = scmp.eq.s32.totalorder %s20, 1
      %p106 = por %p104, %p105
      %p108 = scmp.ne.s32.totalorder %s93, %s107
      %p109 = scmp.eq.s32.totalorder %s20, 0
      %p110 = por %p108, %p109
      %s112 = sadd.s32 %s111, 1
      %p115 = scmp.eq.s32.totalorder %s14, 1
      %p116 = scmp.ne.s32.totalorder %s111, %s113
      %p117 = scmp.eq.s32.totalorder %s14, 0
      %p118 = por %p116, %p117
      %p119 = scmp.ne.s32.totalorder %s111, %s113
      %p120 = scmp.eq.s32.totalorder %s19, 1
      %p121 = por %p119, %p120
      %p122 = scmp.ne.s32.totalorder %s113, %s114
      %p123 = scmp.eq.s32.totalorder %s19, 0
      %p124 = por %p122, %p123
      %p125 = scmp.ne.s32.totalorder %s113, %s114
      %p126 = scmp.eq.s32.totalorder %s20, 1
      %p127 = por %p125, %p126
      %p129 = scmp.ne.s32.totalorder %s114, %s128
      %p130 = scmp.eq.s32.totalorder %s20, 0
      %p131 = por %p129, %p130
      %s132 = ssub.s32 %s14, %s21
      %p133 = scmp.eq.s32.totalorder %s132, 0
      %s135 = sadd.s32 %s134, 1
      %s136 = scalar_select %p133, %s134, %s135
      %p139 = pneg %p133
      %p140 = scmp.eq.s32.totalorder %s14, 1
      %p141 = por %p139, %p140
      %p142 = scmp.ne.s32.totalorder %s134, %s137
      %p143 = scmp.eq.s32.totalorder %s14, 0
      %p144 = por %p142, %p143
      %p145 = scmp.ne.s32.totalorder %s134, %s137
      %p146 = scmp.eq.s32.totalorder %s19, 1
      %p147 = por %p145, %p146
      %p148 = scmp.ne.s32.totalorder %s137, %s138
      %p149 = scmp.eq.s32.totalorder %s19, 0
      %p150 = por %p148, %p149
      %p151 = scmp.ne.s32.totalorder %s137, %s138
      %p152 = scmp.eq.s32.totalorder %s20, 1
      %p153 = por %p151, %p152
      %p155 = scmp.ne.s32.totalorder %s138, %s154
      %p156 = scmp.eq.s32.totalorder %s20, 0
      %p157 = por %p155, %p156
      %p158 = scmp.le.s32.totalorder 1, %s14
      %p159 = scmp.lt.s32.totalorder %s14, 3
      %p160 = pnand %p158, %p159
      %p161 = pneg %p160
      // Predicated region
      $region9: #{tpu_custom_call.1} parent=5 // pred_check
        _
      $region10: #{tpu_custom_call.1} parent=5 // pred_check_branch
        %163 = sbr.rel (%p160) target = $region12
      $region11: #{tpu_custom_call.1} parent=5 // pred_region
        %s164 = ssub.s32 %s14, 1
        // Predicated region
        $region13: #{tpu_custom_call.1} parent=11 // pred_check
          %p165 = pneg %p61
        $region14: #{tpu_custom_call.1} parent=11 // pred_check_branch
          %167 = sbr.rel (%p165) target = $region16
        $region15: #{tpu_custom_call.1} parent=11 // pred_region
          _
        $region16: #{tpu_custom_call.1} parent=11 // pred_fallthru
          _
        // Predicated region
        $region17: #{tpu_custom_call.1} parent=11 // pred_check
          %p168 = pneg %p82
        $region18: #{tpu_custom_call.1} parent=11 // pred_check_branch
          %170 = sbr.rel (%p168) target = $region20
        $region19: #{tpu_custom_call.1} parent=11 // pred_region
          _
        $region20: #{tpu_custom_call.1} parent=11 // pred_fallthru
          _
        // Predicated region
        $region21: #{tpu_custom_call.1} parent=11 // pred_check
          %p171 = pneg %p103
        $region22: #{tpu_custom_call.1} parent=11 // pred_check_branch
          %173 = sbr.rel (%p171) target = $region24
        $region23: #{tpu_custom_call.1} parent=11 // pred_region
          _
        $region24: #{tpu_custom_call.1} parent=11 // pred_fallthru
          _
        // Predicated region
        $region25: #{tpu_custom_call.1} parent=11 // pred_check
          %p174 = pneg %p124
        $region26: #{tpu_custom_call.1} parent=11 // pred_check_branch
          %176 = sbr.rel (%p174) target = $region28
        $region27: #{tpu_custom_call.1} parent=11 // pred_region
          _
        $region28: #{tpu_custom_call.1} parent=11 // pred_fallthru
          _
      $region12: #{tpu_custom_call.1} parent=5 // pred_fallthru
        _
      %p177 = scmp.lt.s32.totalorder %s14, 2
      // Predicated region
      $region29: #{tpu_custom_call.1} parent=5 // pred_check
        %p178 = pneg %p177
      $region30: #{tpu_custom_call.1} parent=5 // pred_check_branch
        %180 = sbr.rel (%p178) target = $region32
      $region31: #{tpu_custom_call.1} parent=5 // pred_region
        // Predicated region
        $region33: #{tpu_custom_call.1} parent=31 // pred_check
          %p181 = pneg %p34
        $region34: #{tpu_custom_call.1} parent=31 // pred_check_branch
          %183 = sbr.rel (%p181) target = $region36
        $region35: #{tpu_custom_call.1} parent=31 // pred_region
          %p184 = scmp.lt.s32.totalorder %s14, 1
          %s185 = scalar_select %p184, %s14, 1
          %s186 = smul.addr %s185, 8
          %s187 = scalar_lea.vmem %s0, %s186
        $region36: #{tpu_custom_call.1} parent=31 // pred_fallthru
          _
      $region32: #{tpu_custom_call.1} parent=5 // pred_fallthru
        _
      %p188 = scmp.le.s32.totalorder 1, %s14
      %p189 = scmp.lt.s32.totalorder %s14, 3
      %p190 = pnand %p188, %p189
      %p191 = pneg %p190
      // Predicated region
      $region37: #{tpu_custom_call.1} parent=5 // pred_check
        _
      $region38: #{tpu_custom_call.1} parent=5 // pred_check_branch
        %193 = sbr.rel (%p190) target = $region40
      $region39: #{tpu_custom_call.1} parent=5 // pred_region
        %s194 = ssub.s32 %s14, 1
        %p195 = scmp.lt.s32.totalorder %s19, 1
        %s196 = scalar_select %p195, %s19, 1
        %s197 = smul.addr %s196, 8
        %s198 = scalar_lea.vmem %s0, %s197
        %p199 = pneg %p40
        %p200 = pneg %p37
        %p201 = pneg %p61
        %p202 = pneg %p58
        %p203 = pneg %p82
        %p204 = pneg %p79
        %p205 = pneg %p103
        %p206 = pneg %p100
        %p207 = pneg %p124
        %p208 = pneg %p121
        %p209 = pneg %p150
        %p210 = pneg %p147
        %s211 = sand.u32 %s137, 1
        %s212 = scalar_lea.sflag [#allocation3], %s211
        %s213 = sand.u32 %s137, 1
        %s214 = smul.addr %s213, 8
        %s215 = scalar_lea.vmem [#allocation2], %s214
        %p216 = scmp.lt.s32.totalorder %s19, 1
        %s217 = scalar_select %p216, %s19, 1
        %s218 = smul.addr %s217, 8
        %s219 = scalar_lea.vmem %s0, %s218
        %v221 = vld [vmem:[%s219] sm:$0xff]
        %v222 = vpack.c.bf16 %v221, %v221
        %v223 = vld [vmem:[%s1] sm:$0xf]
        %v224 = vld [vmem:[%s1 + $0x4] sm:$0xf]
        %v225 = vld [vmem:[%s1 + $0x8] sm:$0xf]
        %v226 = vld [vmem:[%s1 + $0xc] sm:$0xf]
        %v227 = vld [vmem:[%s2] sm:$0x1]
        %v229 = vlaneseq
        %v230 = vshrl.u32 %v229, 7
        %v231 = vsub.s32 0, %v230
        %v232 = vrot.slane %v227, %v231
        %v238 = vunpack.c.l.b16 %v223
        %v239 = vunpack.c.l.b16 %v224
        %v240 = vunpack.c.l.b16 %v225
        %v241 = vunpack.c.l.b16 %v226
        %v242 = vpack.c.b16 %v239, %v238
        %v243 = vpack.c.b16 %v241, %v240
        %vm246 = vcmask 261120
        %v248 = vsel %vm246, %v222, 0
        %250 = vmatprep.subr.bf16.mxu0 0
        %251 = vmatpush1.bf16.msra.mxu0 %v242
        %252 = vmatprep.subr.bf16.mxu0 0
        %253 = vmatpush1.bf16.msra.mxu0 %v243
        %254 = vmatprep.subr.bf16.mxu0 0
        %255 = vmatpush1.bf16.msra.mxu0 0
        %256 = vmatprep.subr.bf16.mxu0 0
        %257 = vmatpush1.bf16.msra.mxu0 0
        %258 = vmatprep.subr.bf16.mxu0 0
        %259 = vmatpush1.bf16.msra.mxu0 0
        %260 = vmatprep.subr.bf16.mxu0 0
        %261 = vmatpush1.bf16.msra.mxu0 0
        %262 = vmatprep.subr.bf16.mxu0 0
        %263 = vmatpush1.bf16.msra.mxu0 0
        %264 = vmatprep.subr.bf16.mxu0 0
        %265 = vmatpush1.bf16.msra.mxu0 0
        %266 = vmatprep.subr.bf16.mxu0 0
        %267 = vmatpush1.bf16.msra.mxu0 0
        %268 = vmatprep.subr.bf16.mxu0 0
        %269 = vmatpush1.bf16.msra.mxu0 0
        %270 = vmatprep.subr.bf16.mxu0 0
        %271 = vmatpush1.bf16.msra.mxu0 0
        %272 = vmatprep.subr.bf16.mxu0 0
        %273 = vmatpush1.bf16.msra.mxu0 0
        %274 = vmatprep.subr.bf16.mxu0 0
        %275 = vmatpush1.bf16.msra.mxu0 0
        %276 = vmatprep.subr.bf16.mxu0 0
        %277 = vmatpush1.bf16.msra.mxu0 0
        %278 = vmatprep.subr.bf16.mxu0 0
        %279 = vmatpush1.bf16.msra.mxu0 0
        %280 = vmatprep.subr.bf16.mxu0 0
        %281 = vmatpush1.bf16.msra.mxu0 0
        %282 = vmatprep.mubr.bf16.mxu0 0
        %283 = vmatmul.mubr.bf16.gmra.mrb[0].mxu0 %v248
        %v284 = vpop.f32.mrb[0].mxu0
        %v285 = vadd.f32 %v232, %v284
        %v286 = vpop.f32.mrb[0].mxu0
        %v287 = vpop.f32.mrb[0].mxu0
        %v288 = vpop.f32.mrb[0].mxu0
        %289 = vdwg.mxu0
        %v290 = vmul.f32 %v285, %v285
        %v291 = vmul.f32 %v285, 0.5
        %v292 = vmul.f32 %v290, 0.035677407
        %v293 = vadd.f32 %v292, 0.7978846
        %v294 = vmul.f32 %v285, %v293
        %v295 = vtanh.pop %v294
        %v296 = vadd.f32 %v295, 1.0
        %v297 = vmul.f32 %v291, %v296
        %v298 = vpack.c.bf16 %v297, %v297
        %v299 = vld [vmem:[%s3] sm:$0xf]
        %v300 = vld [vmem:[%s3 + $0x4] sm:$0xf]
        %v301 = vld [vmem:[%s3 + $0x8] sm:$0xf]
        %v302 = vld [vmem:[%s3 + $0xc] sm:$0xf]
        %v303 = vld [vmem:[%s3 + $0x10] sm:$0xf]
        %v304 = vld [vmem:[%s3 + $0x14] sm:$0xf]
        %v305 = vld [vmem:[%s3 + $0x18] sm:$0xf]
        %v306 = vld [vmem:[%s3 + $0x1c] sm:$0xf]
        %v307 = vld [vmem:[%s3 + $0x20] sm:$0xf]
        %v308 = vld [vmem:[%s3 + $0x24] sm:$0xf]
        %v309 = vld [vmem:[%s3 + $0x28] sm:$0xf]
        %v310 = vld [vmem:[%s3 + $0x2c] sm:$0xf]
        %v311 = vld [vmem:[%s3 + $0x30] sm:$0xf]
        %v312 = vld [vmem:[%s3 + $0x34] sm:$0xf]
        %v313 = vld [vmem:[%s3 + $0x38] sm:$0xf]
        %v314 = vld [vmem:[%s3 + $0x3c] sm:$0xf]
        %v315 = vld [vmem:[%s4] sm:$0x1]
        %v317 = vlaneseq
        %v318 = vshrl.u32 %v317, 7
        %v319 = vsub.s32 0, %v318
        %v320 = vrot.slane %v315, %v319
        %v338 = vunpack.c.l.b16 %v299
        %v339 = vunpack.c.l.b16 %v300
        %v340 = vunpack.c.l.b16 %v301
        %v341 = vunpack.c.l.b16 %v302
        %v342 = vunpack.c.l.b16 %v303
        %v343 = vunpack.c.l.b16 %v304
        %v344 = vunpack.c.l.b16 %v305
        %v345 = vunpack.c.l.b16 %v306
        %v346 = vunpack.c.l.b16 %v307
        %v347 = vunpack.c.l.b16 %v308
        %v348 = vunpack.c.l.b16 %v309
        %v349 = vunpack.c.l.b16 %v310
        %v350 = vunpack.c.l.b16 %v311
        %v351 = vunpack.c.l.b16 %v312
        %v352 = vunpack.c.l.b16 %v313
        %v353 = vunpack.c.l.b16 %v314
        %v354 = vpack.c.b16 %v339, %v338
        %v355 = vpack.c.b16 %v341, %v340
        %v356 = vpack.c.b16 %v343, %v342
        %v357 = vpack.c.b16 %v345, %v344
        %v358 = vpack.c.b16 %v347, %v346
        %v359 = vpack.c.b16 %v349, %v348
        %v360 = vpack.c.b16 %v351, %v350
        %v361 = vpack.c.b16 %v353, %v352
        %370 = vmatprep.subr.bf16.mxu0 0
        %371 = vmatpush1.bf16.msra.mxu0 %v354
        %372 = vmatprep.subr.bf16.mxu0 0
        %373 = vmatpush1.bf16.msra.mxu0 %v355
        %374 = vmatprep.subr.bf16.mxu0 0
        %375 = vmatpush1.bf16.msra.mxu0 %v356
        %376 = vmatprep.subr.bf16.mxu0 0
        %377 = vmatpush1.bf16.msra.mxu0 %v357
        %378 = vmatprep.subr.bf16.mxu0 0
        %379 = vmatpush1.bf16.msra.mxu0 %v358
        %380 = vmatprep.subr.bf16.mxu0 0
        %381 = vmatpush1.bf16.msra.mxu0 %v359
        %382 = vmatprep.subr.bf16.mxu0 0
        %383 = vmatpush1.bf16.msra.mxu0 %v360
        %384 = vmatprep.subr.bf16.mxu0 0
        %385 = vmatpush1.bf16.msra.mxu0 %v361
        %386 = vmatprep.subr.bf16.mxu0 0
        %387 = vmatpush1.bf16.msra.mxu0 0
        %388 = vmatprep.subr.bf16.mxu0 0
        %389 = vmatpush1.bf16.msra.mxu0 0
        %390 = vmatprep.subr.bf16.mxu0 0
        %391 = vmatpush1.bf16.msra.mxu0 0
        %392 = vmatprep.subr.bf16.mxu0 0
        %393 = vmatpush1.bf16.msra.mxu0 0
        %394 = vmatprep.subr.bf16.mxu0 0
        %395 = vmatpush1.bf16.msra.mxu0 0
        %396 = vmatprep.subr.bf16.mxu0 0
        %397 = vmatpush1.bf16.msra.mxu0 0
        %398 = vmatprep.subr.bf16.mxu0 0
        %399 = vmatpush1.bf16.msra.mxu0 0
        %400 = vmatprep.subr.bf16.mxu0 0
        %401 = vmatpush1.bf16.msra.mxu0 0
        %402 = vmatprep.mubr.bf16.mxu0 0
        %403 = vmatmul.mubr.bf16.gmra.mrb[0].mxu0 %v298
        %v404 = vpop.f32.mrb[0].mxu0
        %v405 = vadd.f32 %v320, %v404
        %v406 = vpop.f32.mrb[0].mxu0
        %v407 = vpop.f32.mrb[0].mxu0
        %v408 = vpop.f32.mrb[0].mxu0
        %409 = vdwg.mxu0
        %410 = vst.msk [vmem:[%s215] sm:$0xff] %vm246, %v405
        %s411 = sand.u32 %s137, 1
        %s412 = scalar_lea.sflag [#allocation3], %s411
        %s413 = sand.u32 %s137, 1
        %s414 = smul.addr %s413, 8
        %s415 = scalar_lea.vmem [#allocation2], %s414
        // Predicated region
        $region41: #{tpu_custom_call.1} parent=39 // pred_check
          %p416 = pneg %p147
        $region42: #{tpu_custom_call.1} parent=39 // pred_check_branch
          %418 = sbr.rel (%p416) target = $region44
        $region43: #{tpu_custom_call.1} parent=39 // pred_region
          %s420 = ssub.s32 128, 128
          %421 = vsyncadd %s412, %s420
          %s422 = smul.addr %s19, 128
          %s423 = scalar_lea.hbm %s5, %s422
          %s425 = sshll.u32 %s415, 4
          %s426 = int_to_ptr.vmem [resolvable:$true] %s425
          %428 = dma.vmem_to_hbm [thread:$0]  %s426, 128, %s423, %s412
        $region44: #{tpu_custom_call.1} parent=39 // pred_fallthru
          _
      $region40: #{tpu_custom_call.1} parent=5 // pred_fallthru
        _
      %p429 = scmp.le.s32.totalorder 2, %s14
      // Predicated region
      $region45: #{tpu_custom_call.1} parent=5 // pred_check
        %p430 = pneg %p429
      $region46: #{tpu_custom_call.1} parent=5 // pred_check_branch
        %432 = sbr.rel (%p430) target = $region48
      $region47: #{tpu_custom_call.1} parent=5 // pred_region
        %s433 = ssub.s32 %s14, 2
        // Predicated region
        $region49: #{tpu_custom_call.1} parent=47 // pred_check
          %p434 = pneg %p153
        $region50: #{tpu_custom_call.1} parent=47 // pred_check_branch
          %436 = sbr.rel (%p434) target = $region52
        $region51: #{tpu_custom_call.1} parent=47 // pred_region
          %s437 = sand.u32 %s138, 1
          %s438 = scalar_lea.sflag [#allocation3], %s437
          %s439 = sand.u32 %s138, 1
          %s440 = smul.addr %s439, 8
          %s441 = scalar_lea.vmem [#allocation2], %s440
          %442 = dma.done %s438, 128
        $region52: #{tpu_custom_call.1} parent=47 // pred_fallthru
          _
      $region48: #{tpu_custom_call.1} parent=5 // pred_fallthru
        _
    $region6: #{tpu_custom_call.1} parent=1 // loop_footer
      %s18 = sadd.s32 1, %s14
    $region7: #{tpu_custom_call.1} parent=1 // loop_footer_branch
      %13 = sbr.rel target = $region3
    $region8: #{tpu_custom_call.1} parent=1 // loop_exit
      _
    %443 = vsyncpa [#allocation3], 1
    %s444 = scalar_lea.sflag [#allocation3], 1
    %445 = vsyncpa %s444, 1

</llo_original>
